<compile_context>
chip_gen: v5e
topology: v5e:2x2
jax: 0.10.0
libtpu: 0.0.40
codegen_flags: <defaults>
</compile_context>

<pallas_src>
import functools

import numpy as np
import jax
import jax.numpy as jnp
from jax.experimental import pallas as pl
from jax.experimental.pallas import tpu as pltpu

ARR = (-0.5, 0.0, 0.5)   # taps from the module's __init__ (deterministic params)
ORDER = len(ARR)         # 3


def _image_gradient_kernel(x_ref, o_ref, *, pos, W):
    """x_ref / o_ref: (C, A, B) VMEM tiles.

    pos == 0     : A = D (full differenced axis), B = tile of L = H*W.
    pos in (1,2) : A = tile of D,                 B = L = H*W (full; shift stays in-block).
    """
    C = x_ref.shape[0]
    # Channel sum in f32 (matches conv3d's f32 accumulation; cheap VPU adds).
    s = jnp.sum(x_ref[...].astype(jnp.float32), axis=0)   # (A, B)
    A, B = s.shape

    if pos == 0:
        # Central difference along the sublane (D) axis; full D is resident.
        d_idx = jax.lax.broadcasted_iota(jnp.int32, s.shape, 0)
        s_plus = jnp.where(d_idx == A - 1, 0.0, pltpu.roll(s, shift=A - 1, axis=0))
        s_minus = jnp.where(d_idx == 0, 0.0, pltpu.roll(s, shift=1, axis=0))
    elif pos == 1:
        # Shift by +/-W along the collapsed (H*W) lane axis == shift along H.
        l_idx = jax.lax.broadcasted_iota(jnp.int32, s.shape, 1)
        s_plus = jnp.where(l_idx >= B - W, 0.0, pltpu.roll(s, shift=B - W, axis=1))
        s_minus = jnp.where(l_idx < W, 0.0, pltpu.roll(s, shift=W, axis=1))
    else:  # pos == 2
        # Shift by +/-1 along the collapsed (H*W) lane axis == shift along W;
        # mask at the W-row edges (w_idx derived once, reused for both masks).
        l_idx = jax.lax.broadcasted_iota(jnp.int32, s.shape, 1)
        w_idx = l_idx % W
        s_plus = jnp.where(w_idx == W - 1, 0.0, pltpu.roll(s, shift=B - 1, axis=1))
        s_minus = jnp.where(w_idx == 0, 0.0, pltpu.roll(s, shift=1, axis=1))

    g = (0.5 * (s_plus - s_minus)).astype(o_ref.dtype)
    # All output channels are identical: store per channel instead of
    # materializing a C-times broadcast (keeps vreg pressure ~C x lower).
    for c in range(C):
        o_ref[c] = g


def _largest_aligned_divisor(full, align, unit_bytes, budget):
    """Largest t dividing `full` with t % align == 0 and t*unit_bytes <= budget.
    Falls back to `full` (whole axis in one block) if no aligned divisor fits."""
    if full * unit_bytes <= budget:
        return full
    best = 0
    t = align
    while t <= full:
        if full % t == 0 and t * unit_bytes <= budget:
            best = t
        t += align
    return best if best > 0 else full


def image_gradient(x, pos, *, block_budget_bytes=2 * 1024 * 1024):
    """Pallas equivalent of ImageGradient(in_channels=C, pos).forward(x), x: (N,C,D,H,W)."""
    assert pos in (0, 1, 2)
    N, C, D, H, W = x.shape
    L = H * W
    itemsize = jnp.dtype(x.dtype).itemsize

    # Free contiguous collapse of (H, W) -> L: lane-dense last axis for every pos.
    x4 = x.reshape(N, C, D, L)

    kernel = functools.partial(_image_gradient_kernel, pos=pos, W=W)

    if pos == 0:
        # Full D resident (differenced axis); tile the lane axis L (128-aligned).
        tl = _largest_aligned_divisor(L, 128, C * D * itemsize, block_budget_bytes)
        grid = (N, L // tl)
        block = (None, C, D, tl)
        index_map = lambda n, t: (n, 0, 0, t)
    else:
        # Full L resident (so the lane roll never crosses a block edge); tile D.
        td = _largest_aligned_divisor(D, 8, C * L * itemsize, block_budget_bytes)
        grid = (N, D // td)
        block = (None, C, td, L)
        index_map = lambda n, t: (n, 0, t, 0)

    bytes_accessed = 2 * N * C * D * L * itemsize          # one read + one write pass
    cost = pl.CostEstimate(flops=N * D * L * (C + 2),
                           transcendentals=0,
                           bytes_accessed=bytes_accessed)

    out4 = pl.pallas_call(
        kernel,
        out_shape=jax.ShapeDtypeStruct((N, C, D, L), x.dtype),
        grid=grid,
        in_specs=[pl.BlockSpec(block, index_map)],
        out_specs=pl.BlockSpec(block, index_map),
        compiler_params=pltpu.CompilerParams(
            dimension_semantics=("parallel", "parallel")),
        cost_estimate=cost,
    )(x4)
    return out4.reshape(N, C, D, H, W)


# ---------------- reference (plain JAX, mirrors the PyTorch module) ----------------

def _make_torch_weight(C, pos):
    """Exactly the weight built in ImageGradient.__init__ (deterministic)."""
    if pos == 0:
        k = np.zeros((C, C, ORDER, 1, 1), np.float32)
        k[:, :, :, 0, 0] = ARR
    elif pos == 1:
        k = np.zeros((C, C, 1, ORDER, 1), np.float32)
        k[:, :, 0, :, 0] = ARR
    else:
        k = np.zeros((C, C, 1, 1, ORDER), np.float32)
        k[:, :, 0, 0, :] = ARR
    return jnp.asarray(k)


def image_gradient_ref(x, pos):
    C = x.shape[1]
    w = _make_torch_weight(C, pos)
    padding = [(0, 0), (0, 0), (0, 0)]
    padding[pos] = (1, 1)
    # lax conv is cross-correlation, same as torch.nn.functional.conv3d.
    return jax.lax.conv_general_dilated(
        x, w, window_strides=(1, 1, 1), padding=padding,
        dimension_numbers=("NCDHW", "OIDHW", "NCDHW"))


if __name__ == "__main__":
    key = jax.random.PRNGKey(0)
    N, C, D, H, W = 2, 4, 8, 8, 16   # L = H*W = 128 -> lane-aligned blocks
    x = jax.random.normal(key, (N, C, D, H, W), dtype=jnp.float32)

    for pos in (0, 1, 2):
        y = jax.block_until_ready(image_gradient(x, pos))
        y_ref = image_gradient_ref(x, pos)
        assert y.shape == y_ref.shape == (N, C, D, H, W)
        np.testing.assert_allclose(np.asarray(y), np.asarray(y_ref),
                                   rtol=1e-5, atol=1e-5)

    print("KERNEL_OK")
</pallas_src>

<mosaic_0001>
module attributes {stable_mosaic.version = 11 : i64} {
  func.func @_image_gradient_kernel(%arg0: i32, %arg1: i32, %arg2: memref<1x4x8x128xf32, #tpu.memory_space<vmem>>, %arg3: memref<1x4x8x128xf32, #tpu.memory_space<vmem>>) attributes {dimension_semantics = [#tpu.dimension_semantics<parallel>, #tpu.dimension_semantics<parallel>], iteration_bounds = array<i64: 2, 1>, scalar_prefetch = 0 : i64, scratch_operands = 0 : i64, tpu.core_type = #tpu.core_type<tc>, window_params = [{transform_indices = @transform_0, window_bounds = array<i64: 1, 4, 8, 128>}, {transform_indices = @transform_1, window_bounds = array<i64: 1, 4, 8, 128>}]} {
    %c0 = arith.constant 0 : index
    %c0_0 = arith.constant 0 : index
    %c0_1 = arith.constant 0 : index
    %c0_2 = arith.constant 0 : index
    %0 = vector.load %arg2[%c0, %c0_0, %c0_1, %c0_2] : memref<1x4x8x128xf32, #tpu.memory_space<vmem>>, vector<1x4x8x128xf32>
    %1 = vector.shape_cast %0 : vector<1x4x8x128xf32> to vector<4x8x128xf32>
    %cst = arith.constant dense<0.000000e+00> : vector<8x128xf32>
    %2 = vector.multi_reduction <add>, %1, %cst [0] : vector<4x8x128xf32> to vector<8x128xf32>
    %3 = tpu.iota {dimensions = array<i32: 0>} : vector<8x128xi32>
    %c7_i32 = arith.constant 7 : i32
    %4 = vector.broadcast %c7_i32 : i32 to vector<8x128xi32>
    %5 = arith.cmpi eq, %3, %4 : vector<8x128xi32>
    %c7_i32_3 = arith.constant 7 : i32
    %6 = tpu.dynamic_rotate %2 by %c7_i32_3 dim 0 : vector<8x128xf32>, i32 -> vector<8x128xf32>
    %cst_4 = arith.constant 0.000000e+00 : f32
    %7 = vector.broadcast %cst_4 : f32 to vector<8x128xf32>
    %8 = arith.select %5, %7, %6 : vector<8x128xi1>, vector<8x128xf32>
    %c0_i32 = arith.constant 0 : i32
    %9 = vector.broadcast %c0_i32 : i32 to vector<8x128xi32>
    %10 = arith.cmpi eq, %3, %9 : vector<8x128xi32>
    %c1_i32 = arith.constant 1 : i32
    %11 = tpu.dynamic_rotate %2 by %c1_i32 dim 0 : vector<8x128xf32>, i32 -> vector<8x128xf32>
    %cst_5 = arith.constant 0.000000e+00 : f32
    %12 = vector.broadcast %cst_5 : f32 to vector<8x128xf32>
    %13 = arith.select %10, %12, %11 : vector<8x128xi1>, vector<8x128xf32>
    %14 = arith.subf %8, %13 : vector<8x128xf32>
    %cst_6 = arith.constant 5.000000e-01 : f32
    %15 = vector.broadcast %cst_6 : f32 to vector<8x128xf32>
    %16 = arith.mulf %15, %14 : vector<8x128xf32>
    %c0_7 = arith.constant 0 : index
    %c0_8 = arith.constant 0 : index
    %c0_9 = arith.constant 0 : index
    %c0_10 = arith.constant 0 : index
    %17 = vector.load %arg3[%c0_7, %c0_8, %c0_9, %c0_10] : memref<1x4x8x128xf32, #tpu.memory_space<vmem>>, vector<1x1x8x128xf32>
    %18 = vector.shape_cast %17 : vector<1x1x8x128xf32> to vector<8x128xf32>
    %19 = vector.shape_cast %16 : vector<8x128xf32> to vector<1x1x8x128xf32>
    tpu.vector_store %arg3[%c0_7, %c0_8, %c0_9, %c0_10], %19 {strides = array<i32>} : memref<1x4x8x128xf32, #tpu.memory_space<vmem>>, vector<1x1x8x128xf32>,
    %c0_11 = arith.constant 0 : index
    %c1 = arith.constant 1 : index
    %c0_12 = arith.constant 0 : index
    %c0_13 = arith.constant 0 : index
    %20 = vector.load %arg3[%c0_11, %c1, %c0_12, %c0_13] : memref<1x4x8x128xf32, #tpu.memory_space<vmem>>, vector<1x1x8x128xf32>
    %21 = vector.shape_cast %20 : vector<1x1x8x128xf32> to vector<8x128xf32>
    %22 = vector.shape_cast %16 : vector<8x128xf32> to vector<1x1x8x128xf32>
    tpu.vector_store %arg3[%c0_11, %c1, %c0_12, %c0_13], %22 {strides = array<i32>} : memref<1x4x8x128xf32, #tpu.memory_space<vmem>>, vector<1x1x8x128xf32>,
    %c0_14 = arith.constant 0 : index
    %c2 = arith.constant 2 : index
    %c0_15 = arith.constant 0 : index
    %c0_16 = arith.constant 0 : index
    %23 = vector.load %arg3[%c0_14, %c2, %c0_15, %c0_16] : memref<1x4x8x128xf32, #tpu.memory_space<vmem>>, vector<1x1x8x128xf32>
    %24 = vector.shape_cast %23 : vector<1x1x8x128xf32> to vector<8x128xf32>
    %25 = vector.shape_cast %16 : vector<8x128xf32> to vector<1x1x8x128xf32>
    tpu.vector_store %arg3[%c0_14, %c2, %c0_15, %c0_16], %25 {strides = array<i32>} : memref<1x4x8x128xf32, #tpu.memory_space<vmem>>, vector<1x1x8x128xf32>,
    %c0_17 = arith.constant 0 : index
    %c3 = arith.constant 3 : index
    %c0_18 = arith.constant 0 : index
    %c0_19 = arith.constant 0 : index
    %26 = vector.load %arg3[%c0_17, %c3, %c0_18, %c0_19] : memref<1x4x8x128xf32, #tpu.memory_space<vmem>>, vector<1x1x8x128xf32>
    %27 = vector.shape_cast %26 : vector<1x1x8x128xf32> to vector<8x128xf32>
    %28 = vector.shape_cast %16 : vector<8x128xf32> to vector<1x1x8x128xf32>
    tpu.vector_store %arg3[%c0_17, %c3, %c0_18, %c0_19], %28 {strides = array<i32>} : memref<1x4x8x128xf32, #tpu.memory_space<vmem>>, vector<1x1x8x128xf32>,
    return
  }
  func.func @transform_0(%arg0: i32, %arg1: i32) -> (i32, i32, i32, i32) {
    %c0_i32 = arith.constant 0 : i32
    %c0_i32_0 = arith.constant 0 : i32
    %c0_i32_1 = arith.constant 0 : i32
    return %arg0, %c0_i32, %c0_i32_0, %arg1 : i32, i32, i32, i32
  }
  func.func @transform_1(%arg0: i32, %arg1: i32) -> (i32, i32, i32, i32) {
    %c0_i32 = arith.constant 0 : i32
    %c0_i32_0 = arith.constant 0 : i32
    %c0_i32_1 = arith.constant 0 : i32
    return %arg0, %c0_i32, %c0_i32_0, %arg1 : i32, i32, i32, i32
  }
}

</mosaic_0001>

<llo_original>
// kernel: tpu_custom_call.1
$region0: #{tpu_custom_call.1}
  #allocation0 [shape = 'u32[]', space=smem, size = 0x4, offset = 0x4, fixed_abs, tag = 'smem constant byte address 0x4 - core index']
  #allocation1 [shape = 'u32[72,128]{1,0:T(1,128)}', space=vmem, size = 0x9000, scoped, tag = 'internal scratch']
  %s0 = inlined_call_operand.hbm [shape: f32[2,4,8,128], index: 0, kind: input, shape index: {}]
  %s1 = inlined_call_operand.hbm [shape: f32[2,4,8,128], index: 1, kind: output, shape index: {}]
  %s2 = sld [smem:[#allocation0]]
  $region41: #{tpu_custom_call.1} parent=0
    _
  %s4 = ssub.s32 1, %s2
  %s5 = scalar_select 0, %s4, %s2
  $region1: #{tpu_custom_call.1} parent=0
    #allocation2 [shape = 'u8[32768]{0}', space=vmem, size = 0x8000, scoped, tag = 'input window, operand 0']
    #allocation3 [shape = 's32[2]{0}', space=sflag, size = 0x8, scoped, tag = 'scoped memory for tpu_custom_call.1']
    #allocation4 [shape = 's32[2]{0}', space=sflag, size = 0x8, scoped, tag = 'scoped memory for tpu_custom_call.1']
    #allocation5 [shape = 'u8[32768]{0}', space=vmem, size = 0x8000, scoped, tag = 'output window, operand 0']
    %6 = vsyncpa [#allocation3], 0
    %s7 = scalar_lea.sflag [#allocation3], 1
    %8 = vsyncpa %s7, 0
    %9 = vsyncpa [#allocation4], 0
    %s10 = scalar_lea.sflag [#allocation4], 1
    %11 = vsyncpa %s10, 0
    loop: start=0, step=1, limit=4
    $region2: #{tpu_custom_call.1} parent=1 // loop_pre_header
      _
    $region3: #{tpu_custom_call.1} parent=1 // loop_header
      %s13 = sphi 0, %s17
      %p14 = scmp.ge.s32.totalorder %s13, 4
      %s20 = sphi 0, %s32
      %s21 = sphi 0, %s28
      %s22 = sphi 0, %s20
      %s23 = sphi 0, %s21
      %s24 = sphi 0, %s22
      %s25 = sphi 0, %s23
      %s37 = sphi 0, %s39
      %s40 = sphi 0, %s37
      %s41 = sphi 0, %s40
      %s57 = sphi 0, %s41
      %s65 = sphi 0, %s67
      %s68 = sphi 0, %s65
      %s69 = sphi 0, %s68
      %s85 = sphi 0, %s69
    $region4: #{tpu_custom_call.1} parent=1 // loop_header_branch
      %16 = sbr.rel (%p14) target = $region8
    $region5: #{tpu_custom_call.1} parent=1 // loop_body
      %s18 = ssub.s32 %s13, 1
      %s19 = ssub.s32 %s13, 2
      %s26 = sadd.s32 1, %s21
      %p27 = scmp.ge.s32.totalorder %s26, 1
      %s28 = scalar_select %p27, 0, %s26
      %s29 = sadd.s32 1, %s20
      %s30 = scalar_select %p27, %s29, %s20
      %p31 = scmp.ge.s32.totalorder %s30, 2
      %s32 = scalar_select %p31, 0, %s30
      %s33 = ssub.s32 %s20, %s32
      %s34 = ssub.s32 %s21, %s28
      %s35 = sor.u32 %s33, %s34
      %p36 = scmp.eq.s32.totalorder %s35, 0
      %s38 = sadd.s32 %s37, 1
      %s39 = scalar_select %p36, %s37, %s38
      %p42 = pneg %p36
      %p43 = scmp.eq.s32.totalorder %s13, 1
      %p44 = por %p42, %p43
      %p45 = scmp.ne.s32.totalorder %s37, %s40
      %p46 = scmp.eq.s32.totalorder %s13, 0
      %p47 = por %p45, %p46
      %p48 = scmp.ne.s32.totalorder %s37, %s40
      %p49 = scmp.eq.s32.totalorder %s18, 1
      %p50 = por %p48, %p49
      %p51 = scmp.ne.s32.totalorder %s40, %s41
      %p52 = scmp.eq.s32.totalorder %s18, 0
      %p53 = por %p51, %p52
      %p54 = scmp.ne.s32.totalorder %s40, %s41
      %p55 = scmp.eq.s32.totalorder %s19, 1
      %p56 = por %p54, %p55
      %p58 = scmp.ne.s32.totalorder %s41, %s57
      %p59 = scmp.eq.s32.totalorder %s19, 0
      %p60 = por %p58, %p59
      %s61 = ssub.s32 %s20, %s32
      %s62 = ssub.s32 %s21, %s28
      %s63 = sor.u32 %s61, %s62
      %p64 = scmp.eq.s32.totalorder %s63, 0
      %s66 = sadd.s32 %s65, 1
      %s67 = scalar_select %p64, %s65, %s66
      %p70 = pneg %p64
      %p71 = scmp.eq.s32.totalorder %s13, 1
      %p72 = por %p70, %p71
      %p73 = scmp.ne.s32.totalorder %s65, %s68
      %p74 = scmp.eq.s32.totalorder %s13, 0
      %p75 = por %p73, %p74
      %p76 = scmp.ne.s32.totalorder %s65, %s68
      %p77 = scmp.eq.s32.totalorder %s18, 1
      %p78 = por %p76, %p77
      %p79 = scmp.ne.s32.totalorder %s68, %s69
      %p80 = scmp.eq.s32.totalorder %s18, 0
      %p81 = por %p79, %p80
      %p82 = scmp.ne.s32.totalorder %s68, %s69
      %p83 = scmp.eq.s32.totalorder %s19, 1
      %p84 = por %p82, %p83
      %p86 = scmp.ne.s32.totalorder %s69, %s85
      %p87 = scmp.eq.s32.totalorder %s19, 0
      %p88 = por %p86, %p87
      %p89 = scmp.le.s32.totalorder 1, %s13
      %p90 = scmp.lt.s32.totalorder %s13, 3
      %p91 = pnand %p89, %p90
      %p92 = pneg %p91
      // Predicated region
      $region9: #{tpu_custom_call.1} parent=5 // pred_check
        _
      $region10: #{tpu_custom_call.1} parent=5 // pred_check_branch
        %94 = sbr.rel (%p91) target = $region12
      $region11: #{tpu_custom_call.1} parent=5 // pred_region
        %s95 = ssub.s32 %s13, 1
      $region12: #{tpu_custom_call.1} parent=5 // pred_fallthru
        _
      %p96 = scmp.lt.s32.totalorder %s13, 2
      // Predicated region
      $region13: #{tpu_custom_call.1} parent=5 // pred_check
        %p97 = pneg %p96
      $region14: #{tpu_custom_call.1} parent=5 // pred_check_branch
        %99 = sbr.rel (%p97) target = $region16
      $region15: #{tpu_custom_call.1} parent=5 // pred_region
        // Predicated region
        $region17: #{tpu_custom_call.1} parent=15 // pred_check
          %p100 = pneg %p47
        $region18: #{tpu_custom_call.1} parent=15 // pred_check_branch
          %102 = sbr.rel (%p100) target = $region20
        $region19: #{tpu_custom_call.1} parent=15 // pred_region
          %s103 = sand.u32 %s37, 1
          %s104 = scalar_lea.sflag [#allocation3], %s103
          %s105 = sand.u32 %s37, 1
          %s106 = smul.addr %s105, 32
          %s107 = scalar_lea.vmem [#allocation2], %s106
          %109 = vsyncadd %s104, 0
          %s110 = smul.addr %s20, 4
          %s111 = sadd.s32 %s21, %s110
          %s112 = smul.addr %s111, 8
          %s113 = scalar_lea.hbm %s0, %s112
          %s114 = sshll.u32 %s113, 4
          %s115 = int_to_ptr.hbm [resolvable:$true] %s114
          %s116 = sshll.u32 %s107, 4
          %s117 = int_to_ptr.vmem [resolvable:$true] %s116
          %122 = dma.hbm_to_vmem [thread:$0]  %s115, 512, %s117, %s104, 128, 128, 8
        $region20: #{tpu_custom_call.1} parent=15 // pred_fallthru
          _
      $region16: #{tpu_custom_call.1} parent=5 // pred_fallthru
        _
      %p123 = scmp.le.s32.totalorder 1, %s13
      %p124 = scmp.lt.s32.totalorder %s13, 3
      %p125 = pnand %p123, %p124
      %p126 = pneg %p125
      // Predicated region
      $region21: #{tpu_custom_call.1} parent=5 // pred_check
        _
      $region22: #{tpu_custom_call.1} parent=5 // pred_check_branch
        %128 = sbr.rel (%p125) target = $region24
      $region23: #{tpu_custom_call.1} parent=5 // pred_region
        %s129 = ssub.s32 %s13, 1
        %s130 = sand.u32 %s40, 1
        %s131 = scalar_lea.sflag [#allocation3], %s130
        %s132 = sand.u32 %s40, 1
        %s133 = smul.addr %s132, 32
        %s134 = scalar_lea.vmem [#allocation2], %s133
        // Predicated region
        $region25: #{tpu_custom_call.1} parent=23 // pred_check
          %p135 = pneg %p53
        $region26: #{tpu_custom_call.1} parent=23 // pred_check_branch
          %137 = sbr.rel (%p135) target = $region28
        $region27: #{tpu_custom_call.1} parent=23 // pred_region
          %139 = dma.done %s131, 512
        $region28: #{tpu_custom_call.1} parent=23 // pred_fallthru
          _
        %s140 = sand.u32 %s40, 1
        %s141 = scalar_lea.sflag [#allocation3], %s140
        %s142 = sand.u32 %s40, 1
        %s143 = smul.addr %s142, 32
        %s144 = scalar_lea.vmem [#allocation2], %s143
        %p145 = pneg %p53
        %p146 = pneg %p50
        %p147 = pneg %p81
        %p148 = pneg %p78
        %s149 = sand.u32 %s68, 1
        %s150 = scalar_lea.sflag [#allocation4], %s149
        %s151 = sand.u32 %s68, 1
        %s152 = smul.addr %s151, 32
        %s153 = scalar_lea.vmem [#allocation5], %s152
        %v154 = vld [vmem:[%s134] sm:$0xff]
        %v155 = vld [vmem:[%s134 + $0x8] sm:$0xff]
        %v156 = vld [vmem:[%s134 + $0x10] sm:$0xff]
        %v157 = vld [vmem:[%s134 + $0x18] sm:$0xff]
        %v158 = vadd.f32 %v154, %v155
        %v159 = vadd.f32 %v158, %v156
        %v160 = vadd.f32 %v159, %v157
        %v161 = vlaneseq
        %v162 = vshrl.u32 %v161, 7
        %vm163 = vcmp.eq.s32.totalorder %v162, 7
        %v164 = vrot.slane %v160, 1
        %v165 = vsel %vm163, 0.0, %v164
        %vm166 = vcmp.eq.s32.totalorder %v162, 0
        %v167 = vrot.slane %v160, 7
        %v168 = vsel %vm166, 0.0, %v167
        %v169 = vsub.f32 %v165, %v168
        %v170 = vmul.f32 %v169, 0.5
        %171 = vst [vmem:[%s153] sm:$0xff] %v170
        %s172 = scalar_lea.vmem %s153, 8 [#allocation5]
        %173 = vst [vmem:[%s172] sm:$0xff] %v170
        %s174 = scalar_lea.vmem %s153, 16 [#allocation5]
        %175 = vst [vmem:[%s174] sm:$0xff] %v170
        %s176 = scalar_lea.vmem %s153, 24 [#allocation5]
        %177 = vst [vmem:[%s176] sm:$0xff] %v170
        %s178 = sand.u32 %s68, 1
        %s179 = scalar_lea.sflag [#allocation4], %s178
        %s180 = sand.u32 %s68, 1
        %s181 = smul.addr %s180, 32
        %s182 = scalar_lea.vmem [#allocation5], %s181
        // Predicated region
        $region29: #{tpu_custom_call.1} parent=23 // pred_check
          %p183 = pneg %p78
        $region30: #{tpu_custom_call.1} parent=23 // pred_check_branch
          %185 = sbr.rel (%p183) target = $region32
        $region31: #{tpu_custom_call.1} parent=23 // pred_region
          %187 = vsyncadd %s179, 0
          %s188 = smul.addr %s22, 4
          %s189 = sadd.s32 %s23, %s188
          %s190 = smul.addr %s189, 8
          %s191 = scalar_lea.hbm %s1, %s190
          %s192 = sshll.u32 %s182, 4
          %s193 = int_to_ptr.vmem [resolvable:$true] %s192
          %s194 = sshll.u32 %s191, 4
          %s195 = int_to_ptr.hbm [resolvable:$true] %s194
          %200 = dma.vmem_to_hbm [thread:$0]  %s193, 512, %s195, %s179, 128, 128, 8
        $region32: #{tpu_custom_call.1} parent=23 // pred_fallthru
          _
      $region24: #{tpu_custom_call.1} parent=5 // pred_fallthru
        _
      %p201 = scmp.le.s32.totalorder 2, %s13
      // Predicated region
      $region33: #{tpu_custom_call.1} parent=5 // pred_check
        %p202 = pneg %p201
      $region34: #{tpu_custom_call.1} parent=5 // pred_check_branch
        %204 = sbr.rel (%p202) target = $region36
      $region35: #{tpu_custom_call.1} parent=5 // pred_region
        %s205 = ssub.s32 %s13, 2
        // Predicated region
        $region37: #{tpu_custom_call.1} parent=35 // pred_check
          %p206 = pneg %p84
        $region38: #{tpu_custom_call.1} parent=35 // pred_check_branch
          %208 = sbr.rel (%p206) target = $region40
        $region39: #{tpu_custom_call.1} parent=35 // pred_region
          %s209 = sand.u32 %s69, 1
          %s210 = scalar_lea.sflag [#allocation4], %s209
          %s211 = sand.u32 %s69, 1
          %s212 = smul.addr %s211, 32
          %s213 = scalar_lea.vmem [#allocation5], %s212
          %215 = dma.done %s210, 512
        $region40: #{tpu_custom_call.1} parent=35 // pred_fallthru
          _
      $region36: #{tpu_custom_call.1} parent=5 // pred_fallthru
        _
    $region6: #{tpu_custom_call.1} parent=1 // loop_footer
      %s17 = sadd.s32 1, %s13
    $region7: #{tpu_custom_call.1} parent=1 // loop_footer_branch
      %12 = sbr.rel target = $region3
    $region8: #{tpu_custom_call.1} parent=1 // loop_exit
      _
    %216 = vsyncpa [#allocation3], 1
    %s217 = scalar_lea.sflag [#allocation3], 1
    %218 = vsyncpa %s217, 1
    %219 = vsyncpa [#allocation4], 1
    %s220 = scalar_lea.sflag [#allocation4], 1
    %221 = vsyncpa %s220, 1

</llo_original>
